<compile_context>
chip_gen: v6e
topology: v6e:2x2x1
jax: 0.10.0
libtpu: 0.0.40
codegen_flags: <defaults>
</compile_context>

<pallas_src>
import functools

import jax
import jax.numpy as jnp
from jax.experimental import pallas as pl
from jax.experimental.pallas import tpu as pltpu

LANE = 128    # TPU lane width
SUBLANE = 8   # TPU sublane width


def mlp_kernel(x_ref, w1_ref, b1_ref, w2r_ref, b2_ref, o_ref):
    # ---- layer 1: Linear(F, Hp) + ReLU  (MXU, full f32) ---------------------
    h = jnp.dot(x_ref[...], w1_ref[...],
                preferred_element_type=jnp.float32,
                precision=jax.lax.Precision.HIGHEST)            # (tb, Hp) f32
    h = jnp.maximum(h + b1_ref[...], 0.0)                       # bias + ReLU (VPU)

    # ---- layer 2: Linear(Hp, 1), computed transposed on the MXU -------------
    # w2r_ref is the sublane-replicated output weight row (8, Hp).  The
    # q@k.T-style contraction yields y^T with the batch on the LANE axis, so
    # the store below is lane-dense (no (tb, 1) single-lane masked stores).
    yT = jax.lax.dot_general(
        w2r_ref[...], h,
        dimension_numbers=(((1,), (1,)), ((), ())),
        preferred_element_type=jnp.float32,
        precision=jax.lax.Precision.HIGHEST)                    # (8, tb), rows identical
    y = yT[0:1, :] + b2_ref[0, 0]                               # (1, tb); b2 from SMEM
    o_ref[...] = y.reshape(o_ref.shape).astype(o_ref.dtype)     # (1, 1, tb)


@functools.partial(jax.jit, static_argnames=("block_b",))
def neural_network_forward(x, w1, b1, w2, b2, *, block_b=4096):
    """y = relu(x @ w1 + b1) @ w2 + b2  (weights stored (in, out))."""
    B, F = x.shape
    H, out_dim = w2.shape
    assert w1.shape == (F, H) and b1.shape == (1, H) and b2.shape == (1, out_dim)
    assert out_dim == 1, "kernel specializes the output_size=1 head"

    # Zero-pad the hidden dim to the 128-lane width (padding is exact:
    # relu(0 + 0) = 0 and the padded w2 rows are 0).
    Hp = max(LANE, pl.cdiv(H, LANE) * LANE)
    if Hp != H:
        w1 = jnp.pad(w1, ((0, 0), (0, Hp - H)))
        b1 = jnp.pad(b1, ((0, 0), (0, Hp - H)))
        w2 = jnp.pad(w2, ((0, Hp - H), (0, 0)))
    # Sublane-replicated layer-2 weight row -> aligned (8, Hp) MXU operand.
    w2_rows = jnp.tile(w2.T, (SUBLANE, 1))                      # (8, Hp)

    # Batch tile: whole (small) batch, or block_b rows.  Large tiles amortize
    # the per-grid-step overhead; the x stream is only 4*F bytes/row.
    tb = B if B <= block_b else block_b
    num_tiles = pl.cdiv(B, tb)

    cost = pl.CostEstimate(
        flops=2 * B * F * Hp + 2 * B * Hp * SUBLANE,
        transcendentals=0,
        bytes_accessed=4 * (x.size + w1.size + b1.size + w2_rows.size + 1
                            + num_tiles * tb),
    )

    out = pl.pallas_call(
        mlp_kernel,
        # Lane-dense output slab: one (1, tb) row per batch tile.
        out_shape=jax.ShapeDtypeStruct((num_tiles, 1, tb), jnp.float32),
        grid=(num_tiles,),
        in_specs=[
            pl.BlockSpec((tb, F), lambda i: (i, 0)),            # x: streamed over batch
            pl.BlockSpec((F, Hp), lambda i: (0, 0)),            # w1: resident
            pl.BlockSpec((1, Hp), lambda i: (0, 0)),            # b1: resident
            pl.BlockSpec((SUBLANE, Hp), lambda i: (0, 0)),      # w2 rows: resident
            pl.BlockSpec(memory_space=pltpu.MemorySpace.SMEM),  # b2: scalar in SMEM
        ],
        out_specs=pl.BlockSpec((1, 1, tb), lambda i: (i, 0, 0)),
        compiler_params=pltpu.CompilerParams(
            dimension_semantics=("parallel",),   # multi-TC parts shard batch tiles
        ),
        cost_estimate=cost,
    )(x, w1, b1, w2_rows, b2)

    # Layout plumbing only: flatten the (num_tiles, 1, tb) slab back to (B, 1)
    # (also drops the padded rows of a partial last tile).
    return out.reshape(num_tiles * tb, 1)[:B]


def init_params(key, input_size, hidden_size, output_size):
    # nn.Linear-style init (uniform +/- 1/sqrt(fan_in)); weights pre-transposed
    # to (in, out) so the kernel computes x @ W + b.
    k1, k2, k3, k4 = jax.random.split(key, 4)
    bound1 = 1.0 / jnp.sqrt(input_size)
    bound2 = 1.0 / jnp.sqrt(hidden_size)
    w1 = jax.random.uniform(k1, (input_size, hidden_size), jnp.float32, -bound1, bound1)
    b1 = jax.random.uniform(k2, (1, hidden_size), jnp.float32, -bound1, bound1)
    w2 = jax.random.uniform(k3, (hidden_size, output_size), jnp.float32, -bound2, bound2)
    b2 = jax.random.uniform(k4, (1, output_size), jnp.float32, -bound2, bound2)
    return w1, b1, w2, b2


if __name__ == "__main__":
    input_size = 16    # stands in for X_train.shape[1]
    hidden_size = 32
    output_size = 1

    key = jax.random.PRNGKey(0)
    kx, kp, kx2, kx3 = jax.random.split(key, 4)
    w1, b1, w2, b2 = init_params(kp, input_size, hidden_size, output_size)

    def ref_fwd(x):  # pure-f32 PyTorch-semantics reference
        h = jnp.maximum(jnp.dot(x, w1, precision=jax.lax.Precision.HIGHEST) + b1, 0.0)
        return jnp.dot(h, w2, precision=jax.lax.Precision.HIGHEST) + b2

    # Kernel is full f32 now -> tight tolerance.
    ATOL = RTOL = 1e-5

    # Small batch (single tile; block == full batch).
    x_small = jax.random.normal(kx, (8, input_size), jnp.float32)
    out_small = jax.block_until_ready(neural_network_forward(x_small, w1, b1, w2, b2))
    assert out_small.shape == (8, output_size)
    assert jnp.allclose(out_small, ref_fwd(x_small), atol=ATOL, rtol=RTOL)

    # Multi-tile pipelined batch grid (4 tiles of 256 rows).
    x_multi = jax.random.normal(kx2, (1024, input_size), jnp.float32)
    out_multi = jax.block_until_ready(
        neural_network_forward(x_multi, w1, b1, w2, b2, block_b=256))
    assert out_multi.shape == (1024, output_size)
    assert jnp.allclose(out_multi, ref_fwd(x_multi), atol=ATOL, rtol=RTOL)

    # Ragged batch exercising the partial last tile + wrapper slice.
    x_rag = jax.random.normal(kx3, (1000, input_size), jnp.float32)
    out_rag = jax.block_until_ready(
        neural_network_forward(x_rag, w1, b1, w2, b2, block_b=512))
    assert out_rag.shape == (1000, output_size)
    assert jnp.allclose(out_rag, ref_fwd(x_rag), atol=ATOL, rtol=RTOL)

    print("KERNEL_OK")
</pallas_src>

<mosaic_0001>
module attributes {stable_mosaic.version = 11 : i64} {
  func.func @mlp_kernel(%arg0: i32, %arg1: memref<8x16xf32, #tpu.memory_space<vmem>>, %arg2: memref<16x128xf32, #tpu.memory_space<vmem>>, %arg3: memref<1x128xf32, #tpu.memory_space<vmem>>, %arg4: memref<8x128xf32, #tpu.memory_space<vmem>>, %arg5: memref<1x1xf32, #tpu.memory_space<smem>>, %arg6: memref<1x1x8xf32, #tpu.memory_space<vmem>>) attributes {dimension_semantics = [#tpu.dimension_semantics<parallel>], iteration_bounds = array<i64: 1>, scalar_prefetch = 0 : i64, scratch_operands = 0 : i64, tpu.core_type = #tpu.core_type<tc>, window_params = [{transform_indices = @transform_0, window_bounds = array<i64: 8, 16>}, {pipeline_mode = #tpu.pipeline_mode<synchronous>, transform_indices = @transform_1, window_bounds = array<i64: 16, 128>}, {pipeline_mode = #tpu.pipeline_mode<synchronous>, transform_indices = @transform_2, window_bounds = array<i64: 1, 128>}, {pipeline_mode = #tpu.pipeline_mode<synchronous>, transform_indices = @transform_3, window_bounds = array<i64: 8, 128>}, {transform_indices = @transform_4, window_bounds = array<i64: 1, 1>}, {transform_indices = @transform_5, window_bounds = array<i64: 1, 1, 8>}]} {
    %c0 = arith.constant 0 : index
    %c0_0 = arith.constant 0 : index
    %0 = vector.load %arg1[%c0, %c0_0] : memref<8x16xf32, #tpu.memory_space<vmem>>, vector<8x16xf32>
    %c0_1 = arith.constant 0 : index
    %c0_2 = arith.constant 0 : index
    %1 = vector.load %arg2[%c0_1, %c0_2] : memref<16x128xf32, #tpu.memory_space<vmem>>, vector<16x128xf32>
    %cst = arith.constant dense<0.000000e+00> : vector<8x128xf32>
    %2 = tpu.matmul %0, %1, %cst {dimension_numbers = #tpu.dot_dimension_numbers<[1], [0], [0], [1], [0, 0, 1, 1], [], []>, precision = #tpu.contract_precision<fp32>} : vector<8x16xf32>, vector<16x128xf32>, vector<8x128xf32> -> vector<8x128xf32>
    %c0_3 = arith.constant 0 : index
    %c0_4 = arith.constant 0 : index
    %3 = vector.load %arg3[%c0_3, %c0_4] : memref<1x128xf32, #tpu.memory_space<vmem>>, vector<1x128xf32>
    %4 = vector.broadcast %3 : vector<1x128xf32> to vector<8x128xf32>
    %5 = arith.addf %2, %4 : vector<8x128xf32>
    %cst_5 = arith.constant 0.000000e+00 : f32
    %6 = vector.broadcast %cst_5 : f32 to vector<8x128xf32>
    %7 = arith.maximumf %5, %6 : vector<8x128xf32>
    %c0_6 = arith.constant 0 : index
    %c0_7 = arith.constant 0 : index
    %8 = vector.load %arg4[%c0_6, %c0_7] : memref<8x128xf32, #tpu.memory_space<vmem>>, vector<8x128xf32>
    %cst_8 = arith.constant dense<0.000000e+00> : vector<8x8xf32>
    %9 = tpu.matmul %8, %7, %cst_8 {dimension_numbers = #tpu.dot_dimension_numbers<[1], [1], [0], [0], [0, 0, 1, 0], [], []>, precision = #tpu.contract_precision<fp32>} : vector<8x128xf32>, vector<8x128xf32>, vector<8x8xf32> -> vector<8x8xf32>
    %10 = vector.extract_strided_slice %9 {offsets = [0, 0], sizes = [1, 8], strides = [1, 1]} : vector<8x8xf32> to vector<1x8xf32>
    %c0_9 = arith.constant 0 : index
    %c0_10 = arith.constant 0 : index
    %11 = memref.load %arg5[%c0_9, %c0_10] : memref<1x1xf32, #tpu.memory_space<smem>>
    %12 = vector.broadcast %11 : f32 to vector<1x8xf32>
    %13 = arith.addf %10, %12 : vector<1x8xf32>
    %14 = vector.shape_cast %13 : vector<1x8xf32> to vector<1x1x8xf32>
    %c0_11 = arith.constant 0 : index
    %c0_12 = arith.constant 0 : index
    %c0_13 = arith.constant 0 : index
    %15 = vector.load %arg6[%c0_11, %c0_12, %c0_13] : memref<1x1x8xf32, #tpu.memory_space<vmem>>, vector<1x1x8xf32>
    tpu.vector_store %arg6[%c0_11, %c0_12, %c0_13], %14 {strides = array<i32>} : memref<1x1x8xf32, #tpu.memory_space<vmem>>, vector<1x1x8xf32>,
    return
  }
  func.func @transform_0(%arg0: i32) -> (i32, i32) {
    %c0_i32 = arith.constant 0 : i32
    %c0_i32_0 = arith.constant 0 : i32
    return %arg0, %c0_i32 : i32, i32
  }
  func.func @transform_1(%arg0: i32) -> (i32, i32) {
    %c0_i32 = arith.constant 0 : i32
    %c0_i32_0 = arith.constant 0 : i32
    %c0_i32_1 = arith.constant 0 : i32
    return %c0_i32, %c0_i32_0 : i32, i32
  }
  func.func @transform_2(%arg0: i32) -> (i32, i32) {
    %c0_i32 = arith.constant 0 : i32
    %c0_i32_0 = arith.constant 0 : i32
    %c0_i32_1 = arith.constant 0 : i32
    return %c0_i32, %c0_i32_0 : i32, i32
  }
  func.func @transform_3(%arg0: i32) -> (i32, i32) {
    %c0_i32 = arith.constant 0 : i32
    %c0_i32_0 = arith.constant 0 : i32
    %c0_i32_1 = arith.constant 0 : i32
    return %c0_i32, %c0_i32_0 : i32, i32
  }
  func.func @transform_4(%arg0: i32) -> (i32, i32) {
    %c0_i32 = arith.constant 0 : i32
    %c0_i32_0 = arith.constant 0 : i32
    %c0_i32_1 = arith.constant 0 : i32
    return %c0_i32, %c0_i32_0 : i32, i32
  }
  func.func @transform_5(%arg0: i32) -> (i32, i32, i32) {
    %c0_i32 = arith.constant 0 : i32
    %c0_i32_0 = arith.constant 0 : i32
    %c0_i32_1 = arith.constant 0 : i32
    return %arg0, %c0_i32, %c0_i32_0 : i32, i32, i32
  }
}

</mosaic_0001>

<llo_original>
// kernel: neural_network_forward.1
$region0: #{neural_network_forward.1}
  #allocation0 [shape = 'u32[]', space=smem, size = 0x4, offset = 0x4, fixed_abs, tag = 'smem constant byte address 0x4 - core index']
  #allocation1 [shape = 'u32[144,128]{1,0:T(1,128)}', space=vmem, size = 0x12000, scoped, tag = 'internal scratch']
  #allocation2 [shape = 'f32[1,1]{1,0:T(1,128)S(6)}', space=smem, size = 0x200, scoped, tag = 'scoped memory for neural_network_forward.1']
  %s0 = inlined_call_operand.vmem [shape: f32[8,16], index: 0, kind: input, shape index: {}]
  %s1 = inlined_call_operand.vmem [shape: f32[16,128], index: 1, kind: input, shape index: {}]
  %s2 = inlined_call_operand.vmem [shape: f32[1,128], index: 2, kind: input, shape index: {}]
  %s3 = inlined_call_operand.vmem [shape: f32[8,128], index: 3, kind: input, shape index: {}]
  %s4 = inlined_call_operand.<no memory space> [shape: f32[1,1], index: 4, kind: input, shape index: {}]
  %s5 = inlined_call_operand.hbm [shape: f32[1,1,8], index: 5, kind: output, shape index: {}]
  %s6 = sld [smem:[#allocation0]]
  $region30: #{neural_network_forward.1} parent=0
    _
  %s8 = ssub.s32 1, %s6
  %s9 = scalar_select 0, %s8, %s6
  %10 = sst [smem:[#allocation2]] %s4
  $region1: #{neural_network_forward.1} parent=0
    #allocation3 [shape = 'u8[512]{0}', space=vmem, size = 0x400, scoped, tag = 'output window, operand 0, single buffered']
    #allocation4 [shape = 's32[1]{0}', space=sflag, size = 0x4, scoped, tag = 'scoped memory for neural_network_forward.1']
    %11 = vsyncpa [#allocation4], 0
    // Predicated region
    $region2: #{neural_network_forward.1} parent=1 // pred_check
      _
    $region3: #{neural_network_forward.1} parent=1 // pred_check_branch
      %13 = sbr.rel (0) target = $region5
    $region4: #{neural_network_forward.1} parent=1 // pred_region
      _
    $region5: #{neural_network_forward.1} parent=1 // pred_fallthru
      _
    // Predicated region
    $region6: #{neural_network_forward.1} parent=1 // pred_check
      _
    $region7: #{neural_network_forward.1} parent=1 // pred_check_branch
      %15 = sbr.rel (0) target = $region9
    $region8: #{neural_network_forward.1} parent=1 // pred_region
      _
    $region9: #{neural_network_forward.1} parent=1 // pred_fallthru
      _
    // Predicated region
    $region10: #{neural_network_forward.1} parent=1 // pred_check
      _
    $region11: #{neural_network_forward.1} parent=1 // pred_check_branch
      %17 = sbr.rel (0) target = $region13
    $region12: #{neural_network_forward.1} parent=1 // pred_region
      _
    $region13: #{neural_network_forward.1} parent=1 // pred_fallthru
      _
    // Predicated region
    $region14: #{neural_network_forward.1} parent=1 // pred_check
      _
    $region15: #{neural_network_forward.1} parent=1 // pred_check_branch
      %19 = sbr.rel (0) target = $region17
    $region16: #{neural_network_forward.1} parent=1 // pred_region
      _
    $region17: #{neural_network_forward.1} parent=1 // pred_fallthru
      _
    // Predicated region
    $region18: #{neural_network_forward.1} parent=1 // pred_check
      _
    $region19: #{neural_network_forward.1} parent=1 // pred_check_branch
      %21 = sbr.rel (0) target = $region21
    $region20: #{neural_network_forward.1} parent=1 // pred_region
      _
    $region21: #{neural_network_forward.1} parent=1 // pred_fallthru
      _
    %v22 = vld [vmem:[%s0] sm:$0xff]
    %v23 = vld [vmem:[%s1] sm:$0xff]
    %v24 = vld [vmem:[%s1 + $0x8] sm:$0xff]
    %v25 = vld [vmem:[%s2] sm:$0x1]
    %v27 = vlaneseq
    %v28 = vshrl.u32 %v27, 7
    %v29 = vsub.s32 0, %v28
    %v30 = vrot.slane %v25, %v29
    %vm32 = vcmask 130048
    %v34 = vsel %vm32, %v22, 0
    %36 = vmatprep.subr.mxu0 0.0
    %37 = vmatpush1.msra.mxu0 0.0
    %38 = vmatprep.subr.mxu0 0.0
    %39 = vmatpush1.msra.mxu0 0.0
    %40 = vmatprep.subr.mxu0 0.0
    %41 = vmatpush1.msra.mxu0 0.0
    %42 = vmatprep.subr.mxu0 0.0
    %43 = vmatpush1.msra.mxu0 0.0
    %44 = vmatprep.subr.mxu0 0.0
    %45 = vmatpush1.msra.mxu0 0.0
    %46 = vmatprep.subr.mxu0 0.0
    %47 = vmatpush1.msra.mxu0 0.0
    %48 = vmatprep.subr.mxu0 0.0
    %49 = vmatpush1.msra.mxu0 0.0
    %50 = vmatprep.subr.mxu0 0.0
    %51 = vmatpush1.msra.mxu0 0.0
    %52 = vmatprep.subr.mxu0 0.0
    %53 = vmatpush1.msra.mxu0 0.0
    %54 = vmatprep.subr.mxu0 0.0
    %55 = vmatpush1.msra.mxu0 0.0
    %56 = vmatprep.subr.mxu0 0.0
    %57 = vmatpush1.msra.mxu0 0.0
    %58 = vmatprep.subr.mxu0 0.0
    %59 = vmatpush1.msra.mxu0 0.0
    %60 = vmatprep.subr.mxu0 0.0
    %61 = vmatpush1.msra.mxu0 0.0
    %62 = vmatprep.subr.mxu0 0.0
    %63 = vmatpush1.msra.mxu0 0.0
    %64 = vmatprep.subr.mxu0 0.0
    %v65 = vand.u32 %v24, 4294901760
    %66 = vmatpush1.msra.mxu0 %v65
    %67 = vmatprep.subr.mxu0 0.0
    %v68 = vand.u32 %v23, 4294901760
    %69 = vmatpush1.msra.mxu0 %v68
    %70 = vmatprep.subr.mxu0 0.0
    %71 = vmatpush2.msra.mxu0 0.0
    %72 = vmatprep.subr.mxu0 0.0
    %73 = vmatpush2.msra.mxu0 0.0
    %74 = vmatprep.subr.mxu0 0.0
    %75 = vmatpush2.msra.mxu0 0.0
    %76 = vmatprep.subr.mxu0 0.0
    %77 = vmatpush2.msra.mxu0 0.0
    %78 = vmatprep.subr.mxu0 0.0
    %79 = vmatpush2.msra.mxu0 0.0
    %80 = vmatprep.subr.mxu0 0.0
    %81 = vmatpush2.msra.mxu0 0.0
    %82 = vmatprep.subr.mxu0 0.0
    %83 = vmatpush2.msra.mxu0 0.0
    %84 = vmatprep.subr.mxu0 0.0
    %85 = vmatpush2.msra.mxu0 0.0
    %86 = vmatprep.subr.mxu0 0.0
    %87 = vmatpush2.msra.mxu0 0.0
    %88 = vmatprep.subr.mxu0 0.0
    %89 = vmatpush2.msra.mxu0 0.0
    %90 = vmatprep.subr.mxu0 0.0
    %91 = vmatpush2.msra.mxu0 0.0
    %92 = vmatprep.subr.mxu0 0.0
    %93 = vmatpush2.msra.mxu0 0.0
    %94 = vmatprep.subr.mxu0 0.0
    %95 = vmatpush2.msra.mxu0 0.0
    %96 = vmatprep.subr.mxu0 0.0
    %97 = vmatpush2.msra.mxu0 0.0
    %98 = vmatprep.subr.mxu0 0.0
    %99 = vmatpush2.msra.mxu0 0.0
    %100 = vmatprep.subr.mxu0 0.0
    %101 = vmatpush2.msra.mxu0 0.0
    %102 = vmatprep.mubr.f32.mxu0 0.0
    %v103 = vand.u32 %v34, 4294901760
    %v104 = vsub.f32 %v34, %v103
    %v105 = vand.u32 %v104, 4294901760
    %v106 = vsub.f32 %v104, %v105
    %v107 = vand.u32 %v106, 4294901760
    %108 = vmatmul.mubr.f32.gmra.mxu0 %v107
    %v109 = vpop.f32.mrf.mxu0
    %v110 = vadd.f32 %v30, %v109
    %v111 = vpop.f32.mrf.mxu0
    %112 = vdwg.mxu0
    %113 = vmatprep.subr.mxu0 0.0
    %114 = vmatpush1.msra.mxu0 0.0
    %115 = vmatprep.subr.mxu0 0.0
    %116 = vmatpush1.msra.mxu0 0.0
    %117 = vmatprep.subr.mxu0 0.0
    %118 = vmatpush1.msra.mxu0 0.0
    %119 = vmatprep.subr.mxu0 0.0
    %120 = vmatpush1.msra.mxu0 0.0
    %121 = vmatprep.subr.mxu0 0.0
    %122 = vmatpush1.msra.mxu0 0.0
    %123 = vmatprep.subr.mxu0 0.0
    %124 = vmatpush1.msra.mxu0 0.0
    %125 = vmatprep.subr.mxu0 0.0
    %126 = vmatpush1.msra.mxu0 0.0
    %127 = vmatprep.subr.mxu0 0.0
    %128 = vmatpush1.msra.mxu0 0.0
    %129 = vmatprep.subr.mxu0 0.0
    %130 = vmatpush1.msra.mxu0 0.0
    %131 = vmatprep.subr.mxu0 0.0
    %132 = vmatpush1.msra.mxu0 0.0
    %133 = vmatprep.subr.mxu0 0.0
    %134 = vmatpush1.msra.mxu0 0.0
    %135 = vmatprep.subr.mxu0 0.0
    %136 = vmatpush1.msra.mxu0 0.0
    %137 = vmatprep.subr.mxu0 0.0
    %138 = vmatpush1.msra.mxu0 0.0
    %139 = vmatprep.subr.mxu0 0.0
    %140 = vmatpush1.msra.mxu0 0.0
    %141 = vmatprep.subr.mxu0 0.0
    %v142 = vand.u32 %v24, 4294901760
    %v143 = vsub.f32 %v24, %v142
    %v144 = vand.u32 %v143, 4294901760
    %v145 = vsub.f32 %v143, %v144
    %v146 = vand.u32 %v145, 4294901760
    %147 = vmatpush1.msra.mxu0 %v146
    %148 = vmatprep.subr.mxu0 0.0
    %v149 = vand.u32 %v23, 4294901760
    %v150 = vsub.f32 %v23, %v149
    %v151 = vand.u32 %v150, 4294901760
    %v152 = vsub.f32 %v150, %v151
    %v153 = vand.u32 %v152, 4294901760
    %154 = vmatpush1.msra.mxu0 %v153
    %155 = vmatprep.subr.mxu0 0.0
    %156 = vmatpush2.msra.mxu0 0.0
    %157 = vmatprep.subr.mxu0 0.0
    %158 = vmatpush2.msra.mxu0 0.0
    %159 = vmatprep.subr.mxu0 0.0
    %160 = vmatpush2.msra.mxu0 0.0
    %161 = vmatprep.subr.mxu0 0.0
    %162 = vmatpush2.msra.mxu0 0.0
    %163 = vmatprep.subr.mxu0 0.0
    %164 = vmatpush2.msra.mxu0 0.0
    %165 = vmatprep.subr.mxu0 0.0
    %166 = vmatpush2.msra.mxu0 0.0
    %167 = vmatprep.subr.mxu0 0.0
    %168 = vmatpush2.msra.mxu0 0.0
    %169 = vmatprep.subr.mxu0 0.0
    %170 = vmatpush2.msra.mxu0 0.0
    %171 = vmatprep.subr.mxu0 0.0
    %172 = vmatpush2.msra.mxu0 0.0
    %173 = vmatprep.subr.mxu0 0.0
    %174 = vmatpush2.msra.mxu0 0.0
    %175 = vmatprep.subr.mxu0 0.0
    %176 = vmatpush2.msra.mxu0 0.0
    %177 = vmatprep.subr.mxu0 0.0
    %178 = vmatpush2.msra.mxu0 0.0
    %179 = vmatprep.subr.mxu0 0.0
    %180 = vmatpush2.msra.mxu0 0.0
    %181 = vmatprep.subr.mxu0 0.0
    %182 = vmatpush2.msra.mxu0 0.0
    %183 = vmatprep.subr.mxu0 0.0
    %184 = vmatpush2.msra.mxu0 0.0
    %185 = vmatprep.subr.mxu0 0.0
    %186 = vmatpush2.msra.mxu0 0.0
    %187 = vmatprep.mubr.f32.mxu0 0.0
    %v188 = vand.u32 %v34, 4294901760
    %189 = vmatmul.mubr.f32.gmra.mxu0 %v188
    %v190 = vpop.f32.mrf.mxu0
    %v191 = vadd.f32 %v110, %v190
    %v192 = vpop.f32.mrf.mxu0
    %193 = vdwg.mxu0
    %194 = vmatprep.subr.mxu0 0.0
    %195 = vmatpush1.msra.mxu0 0.0
    %196 = vmatprep.subr.mxu0 0.0
    %197 = vmatpush1.msra.mxu0 0.0
    %198 = vmatprep.subr.mxu0 0.0
    %199 = vmatpush1.msra.mxu0 0.0
    %200 = vmatprep.subr.mxu0 0.0
    %201 = vmatpush1.msra.mxu0 0.0
    %202 = vmatprep.subr.mxu0 0.0
    %203 = vmatpush1.msra.mxu0 0.0
    %204 = vmatprep.subr.mxu0 0.0
    %205 = vmatpush1.msra.mxu0 0.0
    %206 = vmatprep.subr.mxu0 0.0
    %207 = vmatpush1.msra.mxu0 0.0
    %208 = vmatprep.subr.mxu0 0.0
    %209 = vmatpush1.msra.mxu0 0.0
    %210 = vmatprep.subr.mxu0 0.0
    %211 = vmatpush1.msra.mxu0 0.0
    %212 = vmatprep.subr.mxu0 0.0
    %213 = vmatpush1.msra.mxu0 0.0
    %214 = vmatprep.subr.mxu0 0.0
    %215 = vmatpush1.msra.mxu0 0.0
    %216 = vmatprep.subr.mxu0 0.0
    %217 = vmatpush1.msra.mxu0 0.0
    %218 = vmatprep.subr.mxu0 0.0
    %219 = vmatpush1.msra.mxu0 0.0
    %220 = vmatprep.subr.mxu0 0.0
    %221 = vmatpush1.msra.mxu0 0.0
    %222 = vmatprep.subr.mxu0 0.0
    %v223 = vand.u32 %v24, 4294901760
    %v224 = vsub.f32 %v24, %v223
    %225 = vmatpush1.msra.mxu0 %v224
    %226 = vmatprep.subr.mxu0 0.0
    %v227 = vand.u32 %v23, 4294901760
    %v228 = vsub.f32 %v23, %v227
    %229 = vmatpush1.msra.mxu0 %v228
    %230 = vmatprep.subr.mxu0 0.0
    %231 = vmatpush2.msra.mxu0 0.0
    %232 = vmatprep.subr.mxu0 0.0
    %233 = vmatpush2.msra.mxu0 0.0
    %234 = vmatprep.subr.mxu0 0.0
    %235 = vmatpush2.msra.mxu0 0.0
    %236 = vmatprep.subr.mxu0 0.0
    %237 = vmatpush2.msra.mxu0 0.0
    %238 = vmatprep.subr.mxu0 0.0
    %239 = vmatpush2.msra.mxu0 0.0
    %240 = vmatprep.subr.mxu0 0.0
    %241 = vmatpush2.msra.mxu0 0.0
    %242 = vmatprep.subr.mxu0 0.0
    %243 = vmatpush2.msra.mxu0 0.0
    %244 = vmatprep.subr.mxu0 0.0
    %245 = vmatpush2.msra.mxu0 0.0
    %246 = vmatprep.subr.mxu0 0.0
    %247 = vmatpush2.msra.mxu0 0.0
    %248 = vmatprep.subr.mxu0 0.0
    %249 = vmatpush2.msra.mxu0 0.0
    %250 = vmatprep.subr.mxu0 0.0
    %251 = vmatpush2.msra.mxu0 0.0
    %252 = vmatprep.subr.mxu0 0.0
    %253 = vmatpush2.msra.mxu0 0.0
    %254 = vmatprep.subr.mxu0 0.0
    %255 = vmatpush2.msra.mxu0 0.0
    %256 = vmatprep.subr.mxu0 0.0
    %257 = vmatpush2.msra.mxu0 0.0
    %258 = vmatprep.subr.mxu0 0.0
    %259 = vmatpush2.msra.mxu0 0.0
    %260 = vmatprep.subr.mxu0 0.0
    %261 = vmatpush2.msra.mxu0 0.0
    %262 = vmatprep.mubr.f32.mxu0 0.0
    %v263 = vand.u32 %v34, 4294901760
    %v264 = vsub.f32 %v34, %v263
    %265 = vmatmul.mubr.f32.gmra.mxu0 %v264
    %v266 = vpop.f32.mrf.mxu0
    %v267 = vadd.f32 %v191, %v266
    %v268 = vpop.f32.mrf.mxu0
    %269 = vdwg.mxu0
    %270 = vmatprep.subr.mxu0 0.0
    %271 = vmatpush1.msra.mxu0 0.0
    %272 = vmatprep.subr.mxu0 0.0
    %273 = vmatpush1.msra.mxu0 0.0
    %274 = vmatprep.subr.mxu0 0.0
    %275 = vmatpush1.msra.mxu0 0.0
    %276 = vmatprep.subr.mxu0 0.0
    %277 = vmatpush1.msra.mxu0 0.0
    %278 = vmatprep.subr.mxu0 0.0
    %279 = vmatpush1.msra.mxu0 0.0
    %280 = vmatprep.subr.mxu0 0.0
    %281 = vmatpush1.msra.mxu0 0.0
    %282 = vmatprep.subr.mxu0 0.0
    %283 = vmatpush1.msra.mxu0 0.0
    %284 = vmatprep.subr.mxu0 0.0
    %285 = vmatpush1.msra.mxu0 0.0
    %286 = vmatprep.subr.mxu0 0.0
    %287 = vmatpush1.msra.mxu0 0.0
    %288 = vmatprep.subr.mxu0 0.0
    %289 = vmatpush1.msra.mxu0 0.0
    %290 = vmatprep.subr.mxu0 0.0
    %291 = vmatpush1.msra.mxu0 0.0
    %292 = vmatprep.subr.mxu0 0.0
    %293 = vmatpush1.msra.mxu0 0.0
    %294 = vmatprep.subr.mxu0 0.0
    %295 = vmatpush1.msra.mxu0 0.0
    %296 = vmatprep.subr.mxu0 0.0
    %297 = vmatpush1.msra.mxu0 0.0
    %298 = vmatprep.subr.mxu0 0.0
    %v299 = vand.u32 %v24, 4294901760
    %300 = vmatpush1.msra.mxu0 %v299
    %301 = vmatprep.subr.mxu0 0.0
    %v302 = vand.u32 %v23, 4294901760
    %303 = vmatpush1.msra.mxu0 %v302
    %304 = vmatprep.subr.mxu0 0.0
    %305 = vmatpush2.msra.mxu0 0.0
    %306 = vmatprep.subr.mxu0 0.0
    %307 = vmatpush2.msra.mxu0 0.0
    %308 = vmatprep.subr.mxu0 0.0
    %309 = vmatpush2.msra.mxu0 0.0
    %310 = vmatprep.subr.mxu0 0.0
    %311 = vmatpush2.msra.mxu0 0.0
    %312 = vmatprep.subr.mxu0 0.0
    %313 = vmatpush2.msra.mxu0 0.0
    %314 = vmatprep.subr.mxu0 0.0
    %315 = vmatpush2.msra.mxu0 0.0
    %316 = vmatprep.subr.mxu0 0.0
    %317 = vmatpush2.msra.mxu0 0.0
    %318 = vmatprep.subr.mxu0 0.0
    %319 = vmatpush2.msra.mxu0 0.0
    %320 = vmatprep.subr.mxu0 0.0
    %321 = vmatpush2.msra.mxu0 0.0
    %322 = vmatprep.subr.mxu0 0.0
    %323 = vmatpush2.msra.mxu0 0.0
    %324 = vmatprep.subr.mxu0 0.0
    %325 = vmatpush2.msra.mxu0 0.0
    %326 = vmatprep.subr.mxu0 0.0
    %327 = vmatpush2.msra.mxu0 0.0
    %328 = vmatprep.subr.mxu0 0.0
    %329 = vmatpush2.msra.mxu0 0.0
    %330 = vmatprep.subr.mxu0 0.0
    %331 = vmatpush2.msra.mxu0 0.0
    %332 = vmatprep.subr.mxu0 0.0
    %333 = vmatpush2.msra.mxu0 0.0
    %334 = vmatprep.subr.mxu0 0.0
    %335 = vmatpush2.msra.mxu0 0.0
    %336 = vmatprep.mubr.f32.mxu0 0.0
    %v337 = vand.u32 %v34, 4294901760
    %v338 = vsub.f32 %v34, %v337
    %v339 = vand.u32 %v338, 4294901760
    %340 = vmatmul.mubr.f32.gmra.mxu0 %v339
    %v341 = vpop.f32.mrf.mxu0
    %v342 = vadd.f32 %v267, %v341
    %v343 = vpop.f32.mrf.mxu0
    %344 = vdwg.mxu0
    %345 = vmatprep.subr.mxu0 0.0
    %346 = vmatpush1.msra.mxu0 0.0
    %347 = vmatprep.subr.mxu0 0.0
    %348 = vmatpush1.msra.mxu0 0.0
    %349 = vmatprep.subr.mxu0 0.0
    %350 = vmatpush1.msra.mxu0 0.0
    %351 = vmatprep.subr.mxu0 0.0
    %352 = vmatpush1.msra.mxu0 0.0
    %353 = vmatprep.subr.mxu0 0.0
    %354 = vmatpush1.msra.mxu0 0.0
    %355 = vmatprep.subr.mxu0 0.0
    %356 = vmatpush1.msra.mxu0 0.0
    %357 = vmatprep.subr.mxu0 0.0
    %358 = vmatpush1.msra.mxu0 0.0
    %359 = vmatprep.subr.mxu0 0.0
    %360 = vmatpush1.msra.mxu0 0.0
    %361 = vmatprep.subr.mxu0 0.0
    %362 = vmatpush1.msra.mxu0 0.0
    %363 = vmatprep.subr.mxu0 0.0
    %364 = vmatpush1.msra.mxu0 0.0
    %365 = vmatprep.subr.mxu0 0.0
    %366 = vmatpush1.msra.mxu0 0.0
    %367 = vmatprep.subr.mxu0 0.0
    %368 = vmatpush1.msra.mxu0 0.0
    %369 = vmatprep.subr.mxu0 0.0
    %370 = vmatpush1.msra.mxu0 0.0
    %371 = vmatprep.subr.mxu0 0.0
    %372 = vmatpush1.msra.mxu0 0.0
    %373 = vmatprep.subr.mxu0 0.0
    %v374 = vand.u32 %v24, 4294901760
    %v375 = vsub.f32 %v24, %v374
    %v376 = vand.u32 %v375, 4294901760
    %377 = vmatpush1.msra.mxu0 %v376
    %378 = vmatprep.subr.mxu0 0.0
    %v379 = vand.u32 %v23, 4294901760
    %v380 = vsub.f32 %v23, %v379
    %v381 = vand.u32 %v380, 4294901760
    %382 = vmatpush1.msra.mxu0 %v381
    %383 = vmatprep.subr.mxu0 0.0
    %384 = vmatpush2.msra.mxu0 0.0
    %385 = vmatprep.subr.mxu0 0.0
    %386 = vmatpush2.msra.mxu0 0.0
    %387 = vmatprep.subr.mxu0 0.0
    %388 = vmatpush2.msra.mxu0 0.0
    %389 = vmatprep.subr.mxu0 0.0
    %390 = vmatpush2.msra.mxu0 0.0
    %391 = vmatprep.subr.mxu0 0.0
    %392 = vmatpush2.msra.mxu0 0.0
    %393 = vmatprep.subr.mxu0 0.0
    %394 = vmatpush2.msra.mxu0 0.0
    %395 = vmatprep.subr.mxu0 0.0
    %396 = vmatpush2.msra.mxu0 0.0
    %397 = vmatprep.subr.mxu0 0.0
    %398 = vmatpush2.msra.mxu0 0.0
    %399 = vmatprep.subr.mxu0 0.0
    %400 = vmatpush2.msra.mxu0 0.0
    %401 = vmatprep.subr.mxu0 0.0
    %402 = vmatpush2.msra.mxu0 0.0
    %403 = vmatprep.subr.mxu0 0.0
    %404 = vmatpush2.msra.mxu0 0.0
    %405 = vmatprep.subr.mxu0 0.0
    %406 = vmatpush2.msra.mxu0 0.0
    %407 = vmatprep.subr.mxu0 0.0
    %408 = vmatpush2.msra.mxu0 0.0
    %409 = vmatprep.subr.mxu0 0.0
    %410 = vmatpush2.msra.mxu0 0.0
    %411 = vmatprep.subr.mxu0 0.0
    %412 = vmatpush2.msra.mxu0 0.0
    %413 = vmatprep.subr.mxu0 0.0
    %414 = vmatpush2.msra.mxu0 0.0
    %415 = vmatprep.mubr.f32.mxu0 0.0
    %v416 = vand.u32 %v34, 4294901760
    %417 = vmatmul.mubr.f32.gmra.mxu0 %v416
    %v418 = vpop.f32.mrf.mxu0
    %v419 = vadd.f32 %v342, %v418
    %v420 = vpop.f32.mrf.mxu0
    %421 = vdwg.mxu0
    %422 = vmatprep.subr.mxu0 0.0
    %423 = vmatpush1.msra.mxu0 0.0
    %424 = vmatprep.subr.mxu0 0.0
    %425 = vmatpush1.msra.mxu0 0.0
    %426 = vmatprep.subr.mxu0 0.0
    %427 = vmatpush1.msra.mxu0 0.0
    %428 = vmatprep.subr.mxu0 0.0
    %429 = vmatpush1.msra.mxu0 0.0
    %430 = vmatprep.subr.mxu0 0.0
    %431 = vmatpush1.msra.mxu0 0.0
    %432 = vmatprep.subr.mxu0 0.0
    %433 = vmatpush1.msra.mxu0 0.0
    %434 = vmatprep.subr.mxu0 0.0
    %435 = vmatpush1.msra.mxu0 0.0
    %436 = vmatprep.subr.mxu0 0.0
    %437 = vmatpush1.msra.mxu0 0.0
    %438 = vmatprep.subr.mxu0 0.0
    %439 = vmatpush1.msra.mxu0 0.0
    %440 = vmatprep.subr.mxu0 0.0
    %441 = vmatpush1.msra.mxu0 0.0
    %442 = vmatprep.subr.mxu0 0.0
    %443 = vmatpush1.msra.mxu0 0.0
    %444 = vmatprep.subr.mxu0 0.0
    %445 = vmatpush1.msra.mxu0 0.0
    %446 = vmatprep.subr.mxu0 0.0
    %447 = vmatpush1.msra.mxu0 0.0
    %448 = vmatprep.subr.mxu0 0.0
    %449 = vmatpush1.msra.mxu0 0.0
    %450 = vmatprep.subr.mxu0 0.0
    %v451 = vand.u32 %v24, 4294901760
    %452 = vmatpush1.msra.mxu0 %v451
    %453 = vmatprep.subr.mxu0 0.0
    %v454 = vand.u32 %v23, 4294901760
    %455 = vmatpush1.msra.mxu0 %v454
    %456 = vmatprep.subr.mxu0 0.0
    %457 = vmatpush2.msra.mxu0 0.0
    %458 = vmatprep.subr.mxu0 0.0
    %459 = vmatpush2.msra.mxu0 0.0
    %460 = vmatprep.subr.mxu0 0.0
    %461 = vmatpush2.msra.mxu0 0.0
    %462 = vmatprep.subr.mxu0 0.0
    %463 = vmatpush2.msra.mxu0 0.0
    %464 = vmatprep.subr.mxu0 0.0
    %465 = vmatpush2.msra.mxu0 0.0
    %466 = vmatprep.subr.mxu0 0.0
    %467 = vmatpush2.msra.mxu0 0.0
    %468 = vmatprep.subr.mxu0 0.0
    %469 = vmatpush2.msra.mxu0 0.0
    %470 = vmatprep.subr.mxu0 0.0
    %471 = vmatpush2.msra.mxu0 0.0
    %472 = vmatprep.subr.mxu0 0.0
    %473 = vmatpush2.msra.mxu0 0.0
    %474 = vmatprep.subr.mxu0 0.0
    %475 = vmatpush2.msra.mxu0 0.0
    %476 = vmatprep.subr.mxu0 0.0
    %477 = vmatpush2.msra.mxu0 0.0
    %478 = vmatprep.subr.mxu0 0.0
    %479 = vmatpush2.msra.mxu0 0.0
    %480 = vmatprep.subr.mxu0 0.0
    %481 = vmatpush2.msra.mxu0 0.0
    %482 = vmatprep.subr.mxu0 0.0
    %483 = vmatpush2.msra.mxu0 0.0
    %484 = vmatprep.subr.mxu0 0.0
    %485 = vmatpush2.msra.mxu0 0.0
    %486 = vmatprep.subr.mxu0 0.0
    %487 = vmatpush2.msra.mxu0 0.0
    %488 = vmatprep.mubr.f32.mxu0 0.0
    %v489 = vand.u32 %v34, 4294901760
    %490 = vmatmul.mubr.f32.gmra.mxu0 %v489
    %v491 = vpop.f32.mrf.mxu0
    %v492 = vadd.f32 %v419, %v491
    %v493 = vpop.f32.mrf.mxu0
    %494 = vdwg.mxu0
    %v495 = vmax.f32 %v492, 0.0
    %v496 = vld [vmem:[%s3] sm:$0xff]
    %497 = vmatprep.subr.mxu0 0.0
    %498 = vmatpush1.xpose.msra.mxu0 0.0
    %499 = vmatprep.subr.mxu0 0.0
    %500 = vmatpush1.xpose.msra.mxu0 0.0
    %501 = vmatprep.subr.mxu0 0.0
    %502 = vmatpush1.xpose.msra.mxu0 0.0
    %503 = vmatprep.subr.mxu0 0.0
    %504 = vmatpush1.xpose.msra.mxu0 0.0
    %505 = vmatprep.subr.mxu0 0.0
    %506 = vmatpush1.xpose.msra.mxu0 0.0
    %507 = vmatprep.subr.mxu0 0.0
    %508 = vmatpush1.xpose.msra.mxu0 0.0
    %509 = vmatprep.subr.mxu0 0.0
    %510 = vmatpush1.xpose.msra.mxu0 0.0
    %511 = vmatprep.subr.mxu0 0.0
    %512 = vmatpush1.xpose.msra.mxu0 0.0
    %513 = vmatprep.subr.mxu0 0.0
    %514 = vmatpush1.xpose.msra.mxu0 0.0
    %515 = vmatprep.subr.mxu0 0.0
    %516 = vmatpush1.xpose.msra.mxu0 0.0
    %517 = vmatprep.subr.mxu0 0.0
    %518 = vmatpush1.xpose.msra.mxu0 0.0
    %519 = vmatprep.subr.mxu0 0.0
    %520 = vmatpush1.xpose.msra.mxu0 0.0
    %521 = vmatprep.subr.mxu0 0.0
    %522 = vmatpush1.xpose.msra.mxu0 0.0
    %523 = vmatprep.subr.mxu0 0.0
    %524 = vmatpush1.xpose.msra.mxu0 0.0
    %525 = vmatprep.subr.mxu0 0.0
    %526 = vmatpush1.xpose.msra.mxu0 0.0
    %527 = vmatprep.subr.mxu0 0.0
    %v528 = vand.u32 %v495, 4294901760
    %529 = vmatpush1.xpose.msra.mxu0 %v528
    %530 = vmatprep.subr.mxu0 0.0
    %531 = vmatpush2.xpose.msra.mxu0 0.0
    %532 = vmatprep.subr.mxu0 0.0
    %533 = vmatpush2.xpose.msra.mxu0 0.0
    %534 = vmatprep.subr.mxu0 0.0
    %535 = vmatpush2.xpose.msra.mxu0 0.0
    %536 = vmatprep.subr.mxu0 0.0
    %537 = vmatpush2.xpose.msra.mxu0 0.0
    %538 = vmatprep.subr.mxu0 0.0
    %539 = vmatpush2.xpose.msra.mxu0 0.0
    %540 = vmatprep.subr.mxu0 0.0
    %541 = vmatpush2.xpose.msra.mxu0 0.0
    %542 = vmatprep.subr.mxu0 0.0
    %543 = vmatpush2.xpose.msra.mxu0 0.0
    %544 = vmatprep.subr.mxu0 0.0
    %545 = vmatpush2.xpose.msra.mxu0 0.0
    %546 = vmatprep.subr.mxu0 0.0
    %547 = vmatpush2.xpose.msra.mxu0 0.0
    %548 = vmatprep.subr.mxu0 0.0
    %549 = vmatpush2.xpose.msra.mxu0 0.0
    %550 = vmatprep.subr.mxu0 0.0
    %551 = vmatpush2.xpose.msra.mxu0 0.0
    %552 = vmatprep.subr.mxu0 0.0
    %553 = vmatpush2.xpose.msra.mxu0 0.0
    %554 = vmatprep.subr.mxu0 0.0
    %555 = vmatpush2.xpose.msra.mxu0 0.0
    %556 = vmatprep.subr.mxu0 0.0
    %557 = vmatpush2.xpose.msra.mxu0 0.0
    %558 = vmatprep.subr.mxu0 0.0
    %559 = vmatpush2.xpose.msra.mxu0 0.0
    %560 = vmatprep.subr.mxu0 0.0
    %561 = vmatpush2.xpose.msra.mxu0 0.0
    %562 = vmatprep.mubr.f32.mxu0 0.0
    %v563 = vand.u32 %v496, 4294901760
    %v564 = vsub.f32 %v496, %v563
    %v565 = vand.u32 %v564, 4294901760
    %v566 = vsub.f32 %v564, %v565
    %v567 = vand.u32 %v566, 4294901760
    %568 = vmatmul.mubr.f32.gmra.mxu0 %v567
    %v569 = vpop.f32.mrf.mxu0
    %v570 = vadd.f32 0.0, %v569
    %v571 = vpop.f32.mrf.mxu0
    %572 = vdwg.mxu0
    %573 = vmatprep.subr.mxu0 0.0
    %574 = vmatpush1.xpose.msra.mxu0 0.0
    %575 = vmatprep.subr.mxu0 0.0
    %576 = vmatpush1.xpose.msra.mxu0 0.0
    %577 = vmatprep.subr.mxu0 0.0
    %578 = vmatpush1.xpose.msra.mxu0 0.0
    %579 = vmatprep.subr.mxu0 0.0
    %580 = vmatpush1.xpose.msra.mxu0 0.0
    %581 = vmatprep.subr.mxu0 0.0
    %582 = vmatpush1.xpose.msra.mxu0 0.0
    %583 = vmatprep.subr.mxu0 0.0
    %584 = vmatpush1.xpose.msra.mxu0 0.0
    %585 = vmatprep.subr.mxu0 0.0
    %586 = vmatpush1.xpose.msra.mxu0 0.0
    %587 = vmatprep.subr.mxu0 0.0
    %588 = vmatpush1.xpose.msra.mxu0 0.0
    %589 = vmatprep.subr.mxu0 0.0
    %590 = vmatpush1.xpose.msra.mxu0 0.0
    %591 = vmatprep.subr.mxu0 0.0
    %592 = vmatpush1.xpose.msra.mxu0 0.0
    %593 = vmatprep.subr.mxu0 0.0
    %594 = vmatpush1.xpose.msra.mxu0 0.0
    %595 = vmatprep.subr.mxu0 0.0
    %596 = vmatpush1.xpose.msra.mxu0 0.0
    %597 = vmatprep.subr.mxu0 0.0
    %598 = vmatpush1.xpose.msra.mxu0 0.0
    %599 = vmatprep.subr.mxu0 0.0
    %600 = vmatpush1.xpose.msra.mxu0 0.0
    %601 = vmatprep.subr.mxu0 0.0
    %602 = vmatpush1.xpose.msra.mxu0 0.0
    %603 = vmatprep.subr.mxu0 0.0
    %v604 = vand.u32 %v495, 4294901760
    %v605 = vsub.f32 %v495, %v604
    %v606 = vand.u32 %v605, 4294901760
    %v607 = vsub.f32 %v605, %v606
    %v608 = vand.u32 %v607, 4294901760
    %609 = vmatpush1.xpose.msra.mxu0 %v608
    %610 = vmatprep.subr.mxu0 0.0
    %611 = vmatpush2.xpose.msra.mxu0 0.0
    %612 = vmatprep.subr.mxu0 0.0
    %613 = vmatpush2.xpose.msra.mxu0 0.0
    %614 = vmatprep.subr.mxu0 0.0
    %615 = vmatpush2.xpose.msra.mxu0 0.0
    %616 = vmatprep.subr.mxu0 0.0
    %617 = vmatpush2.xpose.msra.mxu0 0.0
    %618 = vmatprep.subr.mxu0 0.0
    %619 = vmatpush2.xpose.msra.mxu0 0.0
    %620 = vmatprep.subr.mxu0 0.0
    %621 = vmatpush2.xpose.msra.mxu0 0.0
    %622 = vmatprep.subr.mxu0 0.0
    %623 = vmatpush2.xpose.msra.mxu0 0.0
    %624 = vmatprep.subr.mxu0 0.0
    %625 = vmatpush2.xpose.msra.mxu0 0.0
    %626 = vmatprep.subr.mxu0 0.0
    %627 = vmatpush2.xpose.msra.mxu0 0.0
    %628 = vmatprep.subr.mxu0 0.0
    %629 = vmatpush2.xpose.msra.mxu0 0.0
    %630 = vmatprep.subr.mxu0 0.0
    %631 = vmatpush2.xpose.msra.mxu0 0.0
    %632 = vmatprep.subr.mxu0 0.0
    %633 = vmatpush2.xpose.msra.mxu0 0.0
    %634 = vmatprep.subr.mxu0 0.0
    %635 = vmatpush2.xpose.msra.mxu0 0.0
    %636 = vmatprep.subr.mxu0 0.0
    %637 = vmatpush2.xpose.msra.mxu0 0.0
    %638 = vmatprep.subr.mxu0 0.0
    %639 = vmatpush2.xpose.msra.mxu0 0.0
    %640 = vmatprep.subr.mxu0 0.0
    %641 = vmatpush2.xpose.msra.mxu0 0.0
    %642 = vmatprep.mubr.f32.mxu0 0.0
    %v643 = vand.u32 %v496, 4294901760
    %644 = vmatmul.mubr.f32.gmra.mxu0 %v643
    %v645 = vpop.f32.mrf.mxu0
    %v646 = vadd.f32 %v570, %v645
    %v647 = vpop.f32.mrf.mxu0
    %648 = vdwg.mxu0
    %649 = vmatprep.subr.mxu0 0.0
    %650 = vmatpush1.xpose.msra.mxu0 0.0
    %651 = vmatprep.subr.mxu0 0.0
    %652 = vmatpush1.xpose.msra.mxu0 0.0
    %653 = vmatprep.subr.mxu0 0.0
    %654 = vmatpush1.xpose.msra.mxu0 0.0
    %655 = vmatprep.subr.mxu0 0.0
    %656 = vmatpush1.xpose.msra.mxu0 0.0
    %657 = vmatprep.subr.mxu0 0.0
    %658 = vmatpush1.xpose.msra.mxu0 0.0
    %659 = vmatprep.subr.mxu0 0.0
    %660 = vmatpush1.xpose.msra.mxu0 0.0
    %661 = vmatprep.subr.mxu0 0.0
    %662 = vmatpush1.xpose.msra.mxu0 0.0
    %663 = vmatprep.subr.mxu0 0.0
    %664 = vmatpush1.xpose.msra.mxu0 0.0
    %665 = vmatprep.subr.mxu0 0.0
    %666 = vmatpush1.xpose.msra.mxu0 0.0
    %667 = vmatprep.subr.mxu0 0.0
    %668 = vmatpush1.xpose.msra.mxu0 0.0
    %669 = vmatprep.subr.mxu0 0.0
    %670 = vmatpush1.xpose.msra.mxu0 0.0
    %671 = vmatprep.subr.mxu0 0.0
    %672 = vmatpush1.xpose.msra.mxu0 0.0
    %673 = vmatprep.subr.mxu0 0.0
    %674 = vmatpush1.xpose.msra.mxu0 0.0
    %675 = vmatprep.subr.mxu0 0.0
    %676 = vmatpush1.xpose.msra.mxu0 0.0
    %677 = vmatprep.subr.mxu0 0.0
    %678 = vmatpush1.xpose.msra.mxu0 0.0
    %679 = vmatprep.subr.mxu0 0.0
    %v680 = vand.u32 %v495, 4294901760
    %v681 = vsub.f32 %v495, %v680
    %682 = vmatpush1.xpose.msra.mxu0 %v681
    %683 = vmatprep.subr.mxu0 0.0
    %684 = vmatpush2.xpose.msra.mxu0 0.0
    %685 = vmatprep.subr.mxu0 0.0
    %686 = vmatpush2.xpose.msra.mxu0 0.0
    %687 = vmatprep.subr.mxu0 0.0
    %688 = vmatpush2.xpose.msra.mxu0 0.0
    %689 = vmatprep.subr.mxu0 0.0
    %690 = vmatpush2.xpose.msra.mxu0 0.0
    %691 = vmatprep.subr.mxu0 0.0
    %692 = vmatpush2.xpose.msra.mxu0 0.0
    %693 = vmatprep.subr.mxu0 0.0
    %694 = vmatpush2.xpose.msra.mxu0 0.0
    %695 = vmatprep.subr.mxu0 0.0
    %696 = vmatpush2.xpose.msra.mxu0 0.0
    %697 = vmatprep.subr.mxu0 0.0
    %698 = vmatpush2.xpose.msra.mxu0 0.0
    %699 = vmatprep.subr.mxu0 0.0
    %700 = vmatpush2.xpose.msra.mxu0 0.0
    %701 = vmatprep.subr.mxu0 0.0
    %702 = vmatpush2.xpose.msra.mxu0 0.0
    %703 = vmatprep.subr.mxu0 0.0
    %704 = vmatpush2.xpose.msra.mxu0 0.0
    %705 = vmatprep.subr.mxu0 0.0
    %706 = vmatpush2.xpose.msra.mxu0 0.0
    %707 = vmatprep.subr.mxu0 0.0
    %708 = vmatpush2.xpose.msra.mxu0 0.0
    %709 = vmatprep.subr.mxu0 0.0
    %710 = vmatpush2.xpose.msra.mxu0 0.0
    %711 = vmatprep.subr.mxu0 0.0
    %712 = vmatpush2.xpose.msra.mxu0 0.0
    %713 = vmatprep.subr.mxu0 0.0
    %714 = vmatpush2.xpose.msra.mxu0 0.0
    %715 = vmatprep.mubr.f32.mxu0 0.0
    %v716 = vand.u32 %v496, 4294901760
    %v717 = vsub.f32 %v496, %v716
    %718 = vmatmul.mubr.f32.gmra.mxu0 %v717
    %v719 = vpop.f32.mrf.mxu0
    %v720 = vadd.f32 %v646, %v719
    %v721 = vpop.f32.mrf.mxu0
    %722 = vdwg.mxu0
    %723 = vmatprep.subr.mxu0 0.0
    %724 = vmatpush1.xpose.msra.mxu0 0.0
    %725 = vmatprep.subr.mxu0 0.0
    %726 = vmatpush1.xpose.msra.mxu0 0.0
    %727 = vmatprep.subr.mxu0 0.0
    %728 = vmatpush1.xpose.msra.mxu0 0.0
    %729 = vmatprep.subr.mxu0 0.0
    %730 = vmatpush1.xpose.msra.mxu0 0.0
    %731 = vmatprep.subr.mxu0 0.0
    %732 = vmatpush1.xpose.msra.mxu0 0.0
    %733 = vmatprep.subr.mxu0 0.0
    %734 = vmatpush1.xpose.msra.mxu0 0.0
    %735 = vmatprep.subr.mxu0 0.0
    %736 = vmatpush1.xpose.msra.mxu0 0.0
    %737 = vmatprep.subr.mxu0 0.0
    %738 = vmatpush1.xpose.msra.mxu0 0.0
    %739 = vmatprep.subr.mxu0 0.0
    %740 = vmatpush1.xpose.msra.mxu0 0.0
    %741 = vmatprep.subr.mxu0 0.0
    %742 = vmatpush1.xpose.msra.mxu0 0.0
    %743 = vmatprep.subr.mxu0 0.0
    %744 = vmatpush1.xpose.msra.mxu0 0.0
    %745 = vmatprep.subr.mxu0 0.0
    %746 = vmatpush1.xpose.msra.mxu0 0.0
    %747 = vmatprep.subr.mxu0 0.0
    %748 = vmatpush1.xpose.msra.mxu0 0.0
    %749 = vmatprep.subr.mxu0 0.0
    %750 = vmatpush1.xpose.msra.mxu0 0.0
    %751 = vmatprep.subr.mxu0 0.0
    %752 = vmatpush1.xpose.msra.mxu0 0.0
    %753 = vmatprep.subr.mxu0 0.0
    %v754 = vand.u32 %v495, 4294901760
    %755 = vmatpush1.xpose.msra.mxu0 %v754
    %756 = vmatprep.subr.mxu0 0.0
    %757 = vmatpush2.xpose.msra.mxu0 0.0
    %758 = vmatprep.subr.mxu0 0.0
    %759 = vmatpush2.xpose.msra.mxu0 0.0
    %760 = vmatprep.subr.mxu0 0.0
    %761 = vmatpush2.xpose.msra.mxu0 0.0
    %762 = vmatprep.subr.mxu0 0.0
    %763 = vmatpush2.xpose.msra.mxu0 0.0
    %764 = vmatprep.subr.mxu0 0.0
    %765 = vmatpush2.xpose.msra.mxu0 0.0
    %766 = vmatprep.subr.mxu0 0.0
    %767 = vmatpush2.xpose.msra.mxu0 0.0
    %768 = vmatprep.subr.mxu0 0.0
    %769 = vmatpush2.xpose.msra.mxu0 0.0
    %770 = vmatprep.subr.mxu0 0.0
    %771 = vmatpush2.xpose.msra.mxu0 0.0
    %772 = vmatprep.subr.mxu0 0.0
    %773 = vmatpush2.xpose.msra.mxu0 0.0
    %774 = vmatprep.subr.mxu0 0.0
    %775 = vmatpush2.xpose.msra.mxu0 0.0
    %776 = vmatprep.subr.mxu0 0.0
    %777 = vmatpush2.xpose.msra.mxu0 0.0
    %778 = vmatprep.subr.mxu0 0.0
    %779 = vmatpush2.xpose.msra.mxu0 0.0
    %780 = vmatprep.subr.mxu0 0.0
    %781 = vmatpush2.xpose.msra.mxu0 0.0
    %782 = vmatprep.subr.mxu0 0.0
    %783 = vmatpush2.xpose.msra.mxu0 0.0
    %784 = vmatprep.subr.mxu0 0.0
    %785 = vmatpush2.xpose.msra.mxu0 0.0
    %786 = vmatprep.subr.mxu0 0.0
    %787 = vmatpush2.xpose.msra.mxu0 0.0
    %788 = vmatprep.mubr.f32.mxu0 0.0
    %v789 = vand.u32 %v496, 4294901760
    %v790 = vsub.f32 %v496, %v789
    %v791 = vand.u32 %v790, 4294901760
    %792 = vmatmul.mubr.f32.gmra.mxu0 %v791
    %v793 = vpop.f32.mrf.mxu0
    %v794 = vadd.f32 %v720, %v793
    %v795 = vpop.f32.mrf.mxu0
    %796 = vdwg.mxu0
    %797 = vmatprep.subr.mxu0 0.0
    %798 = vmatpush1.xpose.msra.mxu0 0.0
    %799 = vmatprep.subr.mxu0 0.0
    %800 = vmatpush1.xpose.msra.mxu0 0.0
    %801 = vmatprep.subr.mxu0 0.0
    %802 = vmatpush1.xpose.msra.mxu0 0.0
    %803 = vmatprep.subr.mxu0 0.0
    %804 = vmatpush1.xpose.msra.mxu0 0.0
    %805 = vmatprep.subr.mxu0 0.0
    %806 = vmatpush1.xpose.msra.mxu0 0.0
    %807 = vmatprep.subr.mxu0 0.0
    %808 = vmatpush1.xpose.msra.mxu0 0.0
    %809 = vmatprep.subr.mxu0 0.0
    %810 = vmatpush1.xpose.msra.mxu0 0.0
    %811 = vmatprep.subr.mxu0 0.0
    %812 = vmatpush1.xpose.msra.mxu0 0.0
    %813 = vmatprep.subr.mxu0 0.0
    %814 = vmatpush1.xpose.msra.mxu0 0.0
    %815 = vmatprep.subr.mxu0 0.0
    %816 = vmatpush1.xpose.msra.mxu0 0.0
    %817 = vmatprep.subr.mxu0 0.0
    %818 = vmatpush1.xpose.msra.mxu0 0.0
    %819 = vmatprep.subr.mxu0 0.0
    %820 = vmatpush1.xpose.msra.mxu0 0.0
    %821 = vmatprep.subr.mxu0 0.0
    %822 = vmatpush1.xpose.msra.mxu0 0.0
    %823 = vmatprep.subr.mxu0 0.0
    %824 = vmatpush1.xpose.msra.mxu0 0.0
    %825 = vmatprep.subr.mxu0 0.0
    %826 = vmatpush1.xpose.msra.mxu0 0.0
    %827 = vmatprep.subr.mxu0 0.0
    %v828 = vand.u32 %v495, 4294901760
    %v829 = vsub.f32 %v495, %v828
    %v830 = vand.u32 %v829, 4294901760
    %831 = vmatpush1.xpose.msra.mxu0 %v830
    %832 = vmatprep.subr.mxu0 0.0
    %833 = vmatpush2.xpose.msra.mxu0 0.0
    %834 = vmatprep.subr.mxu0 0.0
    %835 = vmatpush2.xpose.msra.mxu0 0.0
    %836 = vmatprep.subr.mxu0 0.0
    %837 = vmatpush2.xpose.msra.mxu0 0.0
    %838 = vmatprep.subr.mxu0 0.0
    %839 = vmatpush2.xpose.msra.mxu0 0.0
    %840 = vmatprep.subr.mxu0 0.0
    %841 = vmatpush2.xpose.msra.mxu0 0.0
    %842 = vmatprep.subr.mxu0 0.0
    %843 = vmatpush2.xpose.msra.mxu0 0.0
    %844 = vmatprep.subr.mxu0 0.0
    %845 = vmatpush2.xpose.msra.mxu0 0.0
    %846 = vmatprep.subr.mxu0 0.0
    %847 = vmatpush2.xpose.msra.mxu0 0.0
    %848 = vmatprep.subr.mxu0 0.0
    %849 = vmatpush2.xpose.msra.mxu0 0.0
    %850 = vmatprep.subr.mxu0 0.0
    %851 = vmatpush2.xpose.msra.mxu0 0.0
    %852 = vmatprep.subr.mxu0 0.0
    %853 = vmatpush2.xpose.msra.mxu0 0.0
    %854 = vmatprep.subr.mxu0 0.0
    %855 = vmatpush2.xpose.msra.mxu0 0.0
    %856 = vmatprep.subr.mxu0 0.0
    %857 = vmatpush2.xpose.msra.mxu0 0.0
    %858 = vmatprep.subr.mxu0 0.0
    %859 = vmatpush2.xpose.msra.mxu0 0.0
    %860 = vmatprep.subr.mxu0 0.0
    %861 = vmatpush2.xpose.msra.mxu0 0.0
    %862 = vmatprep.subr.mxu0 0.0
    %863 = vmatpush2.xpose.msra.mxu0 0.0
    %864 = vmatprep.mubr.f32.mxu0 0.0
    %v865 = vand.u32 %v496, 4294901760
    %866 = vmatmul.mubr.f32.gmra.mxu0 %v865
    %v867 = vpop.f32.mrf.mxu0
    %v868 = vadd.f32 %v794, %v867
    %v869 = vpop.f32.mrf.mxu0
    %870 = vdwg.mxu0
    %871 = vmatprep.subr.mxu0 0.0
    %872 = vmatpush1.xpose.msra.mxu0 0.0
    %873 = vmatprep.subr.mxu0 0.0
    %874 = vmatpush1.xpose.msra.mxu0 0.0
    %875 = vmatprep.subr.mxu0 0.0
    %876 = vmatpush1.xpose.msra.mxu0 0.0
    %877 = vmatprep.subr.mxu0 0.0
    %878 = vmatpush1.xpose.msra.mxu0 0.0
    %879 = vmatprep.subr.mxu0 0.0
    %880 = vmatpush1.xpose.msra.mxu0 0.0
    %881 = vmatprep.subr.mxu0 0.0
    %882 = vmatpush1.xpose.msra.mxu0 0.0
    %883 = vmatprep.subr.mxu0 0.0
    %884 = vmatpush1.xpose.msra.mxu0 0.0
    %885 = vmatprep.subr.mxu0 0.0
    %886 = vmatpush1.xpose.msra.mxu0 0.0
    %887 = vmatprep.subr.mxu0 0.0
    %888 = vmatpush1.xpose.msra.mxu0 0.0
    %889 = vmatprep.subr.mxu0 0.0
    %890 = vmatpush1.xpose.msra.mxu0 0.0
    %891 = vmatprep.subr.mxu0 0.0
    %892 = vmatpush1.xpose.msra.mxu0 0.0
    %893 = vmatprep.subr.mxu0 0.0
    %894 = vmatpush1.xpose.msra.mxu0 0.0
    %895 = vmatprep.subr.mxu0 0.0
    %896 = vmatpush1.xpose.msra.mxu0 0.0
    %897 = vmatprep.subr.mxu0 0.0
    %898 = vmatpush1.xpose.msra.mxu0 0.0
    %899 = vmatprep.subr.mxu0 0.0
    %900 = vmatpush1.xpose.msra.mxu0 0.0
    %901 = vmatprep.subr.mxu0 0.0
    %v902 = vand.u32 %v495, 4294901760
    %903 = vmatpush1.xpose.msra.mxu0 %v902
    %904 = vmatprep.subr.mxu0 0.0
    %905 = vmatpush2.xpose.msra.mxu0 0.0
    %906 = vmatprep.subr.mxu0 0.0
    %907 = vmatpush2.xpose.msra.mxu0 0.0
    %908 = vmatprep.subr.mxu0 0.0
    %909 = vmatpush2.xpose.msra.mxu0 0.0
    %910 = vmatprep.subr.mxu0 0.0
    %911 = vmatpush2.xpose.msra.mxu0 0.0
    %912 = vmatprep.subr.mxu0 0.0
    %913 = vmatpush2.xpose.msra.mxu0 0.0
    %914 = vmatprep.subr.mxu0 0.0
    %915 = vmatpush2.xpose.msra.mxu0 0.0
    %916 = vmatprep.subr.mxu0 0.0
    %917 = vmatpush2.xpose.msra.mxu0 0.0
    %918 = vmatprep.subr.mxu0 0.0
    %919 = vmatpush2.xpose.msra.mxu0 0.0
    %920 = vmatprep.subr.mxu0 0.0
    %921 = vmatpush2.xpose.msra.mxu0 0.0
    %922 = vmatprep.subr.mxu0 0.0
    %923 = vmatpush2.xpose.msra.mxu0 0.0
    %924 = vmatprep.subr.mxu0 0.0
    %925 = vmatpush2.xpose.msra.mxu0 0.0
    %926 = vmatprep.subr.mxu0 0.0
    %927 = vmatpush2.xpose.msra.mxu0 0.0
    %928 = vmatprep.subr.mxu0 0.0
    %929 = vmatpush2.xpose.msra.mxu0 0.0
    %930 = vmatprep.subr.mxu0 0.0
    %931 = vmatpush2.xpose.msra.mxu0 0.0
    %932 = vmatprep.subr.mxu0 0.0
    %933 = vmatpush2.xpose.msra.mxu0 0.0
    %934 = vmatprep.subr.mxu0 0.0
    %935 = vmatpush2.xpose.msra.mxu0 0.0
    %936 = vmatprep.mubr.f32.mxu0 0.0
    %v937 = vand.u32 %v496, 4294901760
    %938 = vmatmul.mubr.f32.gmra.mxu0 %v937
    %v939 = vpop.f32.mrf.mxu0
    %v940 = vadd.f32 %v868, %v939
    %v941 = vpop.f32.mrf.mxu0
    %942 = vdwg.mxu0
    %s943 = sld [smem:[#allocation2]]
    %v944 = vstv %s943
    %v945 = vadd.f32 %v940, %v944
    %vm946 = vcmask 57344
    %947 = vst.msk [vmem:[#allocation3] sm:$0x1] %vm946, %v945
    // Predicated region
    $region22: #{neural_network_forward.1} parent=1 // pred_check
      _
    $region23: #{neural_network_forward.1} parent=1 // pred_check_branch
      %949 = sbr.rel (0) target = $region25
    $region24: #{neural_network_forward.1} parent=1 // pred_region
      %s951 = ssub.s32 16, 16
      %952 = vsyncadd [#allocation4], %s951
      %s954 = sshll.u32 [#allocation3], 4
      %s955 = int_to_ptr.vmem [resolvable:$true] %s954
      %957 = dma.vmem_to_hbm [thread:$0]  %s955, 16, %s5, [#allocation4]
    $region25: #{neural_network_forward.1} parent=1 // pred_fallthru
      _
    // Predicated region
    $region26: #{neural_network_forward.1} parent=1 // pred_check
      _
    $region27: #{neural_network_forward.1} parent=1 // pred_check_branch
      %959 = sbr.rel (0) target = $region29
    $region28: #{neural_network_forward.1} parent=1 // pred_region
      %960 = dma.done [#allocation4], 16
    $region29: #{neural_network_forward.1} parent=1 // pred_fallthru
      _
    %961 = vsyncpa [#allocation4], 1

</llo_original>
